<compile_context>
chip_gen: v7x
topology: tpu7x:2x2x1
jax: 0.10.0
libtpu: 0.0.40
codegen_flags: <defaults>
</compile_context>

<pallas_src>
import functools

import jax
import jax.numpy as jnp
from jax.experimental import pallas as pl
from jax.experimental.pallas import tpu as pltpu

# ---- model hyper-parameters (constructor args of Model3D, small for demo) ----
INIT_DIM = 7
RANDOM_SIGNAL_DIM = 1
F_IN = INIT_DIM + RANDOM_SIGNAL_DIM            # 8
HIDDEN_DIM = 128
EMBED_DIM = 32
OUT_PAD = 128                                  # lane-dense output width (>= EMBED_DIM)
EPS = 0.0                                      # GINEConv default eps (train_eps=False)

# ---- problem sizes ----
N_NODES = 16
N_EDGES = 64

# ---- weight-slab row offsets (packed once at init) ----
_W1_ROW = 0                                    # rows [0, F_IN)        : w1  [F, H]
_B1_ROW = F_IN                                 # row  F_IN             : b1  [1, H]
_W2_ROW = F_IN + 1                             # rows [F+1, F+1+H)     : w2  [H, OUT_PAD]
_B2_ROW = F_IN + 1 + HIDDEN_DIM                # row  F+1+H            : b2  [1, OUT_PAD]
_W_ROWS = _B2_ROW + 1                          # 138


def _gine_kernel(data_ref, w_ref, out_ref, *, eps):
    """One GINEConv layer + its 2-layer MLP, fully inside VMEM (2 input DMAs)."""
    e = data_ref.shape[1]
    n = data_ref.shape[0] - 3 - e              # data slab is [N+2, E] + [1, E] + [E, E]

    data = data_ref[...]
    w = w_ref[...]

    # ---- unpack the data slab (all static slices) ----
    x_cat = data[0:n, 0:F_IN]                                    # [N, F]
    b_mat = data[0:n + 2, 0:F_IN]                                # [N+2, F] = [x_cat; we; be]
    dst_row = data[n + 2:n + 3, :].astype(jnp.int32)             # [1, E]
    src_col = data[n + 3:n + 3 + e, 0:1].astype(jnp.int32)       # [E, 1]
    ea_col = data[n + 3:n + 3 + e, 1:2]                          # [E, 1]

    # ---- fused gather + edge embedding on one MXU pass ----
    # A[e, j] = (src[e]==j) for j<N ; ea[e] for j==N ; 1 for j==N+1
    col = jax.lax.broadcasted_iota(jnp.int32, (e, n + 2), 1)
    oh_src = (col == src_col).astype(jnp.float32)
    a_mat = jnp.where(col < n, oh_src, jnp.where(col == n, ea_col, 1.0))   # [E, N+2]
    # msg[e, f] = relu(x_cat[src[e], f] + ea[e]*we[f] + be[f])
    msg = jnp.maximum(
        jnp.dot(a_mat, b_mat, preferred_element_type=jnp.float32), 0.0)    # [E, F]

    # ---- scatter-add over dst via one-hot matmul ----
    oh_dst = (jax.lax.broadcasted_iota(jnp.int32, (n, e), 0) == dst_row
              ).astype(jnp.float32)                                        # [N, E]
    aggr = jnp.dot(oh_dst, msg, preferred_element_type=jnp.float32)        # [N, F]

    # ---- GIN update ----
    h = (1.0 + eps) * x_cat + aggr                                         # [N, F]

    # ---- MLP (both layers on the MXU, biases from the resident weight slab) ----
    w1 = w[_W1_ROW:_B1_ROW, :]                                             # [F, H]
    b1 = w[_B1_ROW:_B1_ROW + 1, :]                                         # [1, H]
    z = jnp.maximum(jnp.dot(h, w1, preferred_element_type=jnp.float32) + b1, 0.0)

    w2 = w[_W2_ROW:_B2_ROW, :]                                             # [H, OUT_PAD]
    b2 = w[_B2_ROW:_B2_ROW + 1, :]                                         # [1, OUT_PAD]
    # Lane-dense [N, 128] output; lanes >= EMBED_DIM carry zero weights/bias.
    out_ref[...] = jnp.dot(z, w2, preferred_element_type=jnp.float32) + b2


def pack_params(params):
    """One-time packing (hoisted out of the per-call path)."""
    w_slab = jnp.zeros((_W_ROWS, OUT_PAD), jnp.float32)
    w_slab = w_slab.at[_W1_ROW:_B1_ROW, :HIDDEN_DIM].set(params["w1"])
    w_slab = w_slab.at[_B1_ROW, :HIDDEN_DIM].set(params["b1"][0])
    w_slab = w_slab.at[_W2_ROW:_B2_ROW, :EMBED_DIM].set(params["w2"])
    w_slab = w_slab.at[_B2_ROW, :EMBED_DIM].set(params["b2"][0])
    webe = jnp.concatenate([params["we"], params["be"]], axis=0)           # [2, F]
    return w_slab, webe


@jax.jit
def model3d_forward(x, edge_index, edge_attr, signal, w_slab, webe):
    """Wrapper: build one packed data slab + single Pallas GINEConv kernel call."""
    f32 = jnp.float32
    n = x.shape[0]
    e = edge_index.shape[1]
    assert e >= F_IN and e >= 2, "edge count must be >= feature width for slab packing"

    # RandomSignal: x_cat = concat([x, signal], 1)  (signal drawn by the caller).
    x_cat = jnp.concatenate([x.astype(f32), signal.astype(f32)], axis=1)   # [N, F]

    # ---- single dynamic data slab (one DMA), lane width = E ----
    # rows [0, N+2): [x_cat; we; be] zero-padded to E lanes
    # row  N+2     : dst as f32 row
    # rows [N+3, N+3+E): src (lane 0) and edge_attr (lane 1) as columns
    top = jnp.pad(jnp.concatenate([x_cat, webe.astype(f32)], axis=0),
                  ((0, 0), (0, e - F_IN)))                                 # [N+2, E]
    dst_row = edge_index[1:2].astype(f32)                                  # [1, E]
    edge_block = jnp.pad(
        jnp.concatenate([edge_index[0].reshape(e, 1).astype(f32),
                         edge_attr.reshape(e, 1).astype(f32)], axis=1),
        ((0, 0), (0, e - 2)))                                              # [E, E]
    data = jnp.concatenate([top, dst_row, edge_block], axis=0)             # [N+3+E, E]

    vmem = pl.BlockSpec(memory_space=pltpu.MemorySpace.VMEM)
    cost = pl.CostEstimate(
        flops=2 * (e * (n + 2) * F_IN + n * e * F_IN
                   + n * F_IN * HIDDEN_DIM + n * HIDDEN_DIM * OUT_PAD),
        transcendentals=0,
        bytes_accessed=4 * (data.size + w_slab.size + n * OUT_PAD),
    )

    out_pad = pl.pallas_call(
        functools.partial(_gine_kernel, eps=EPS),
        out_shape=jax.ShapeDtypeStruct((n, OUT_PAD), jnp.float32),
        in_specs=[vmem, vmem],
        out_specs=vmem,
        cost_estimate=cost,
    )(data, w_slab)

    return out_pad[:, :EMBED_DIM]


def _reference_forward(x_cat, edge_index, edge_attr, params):
    """Independent pure-JAX reference of the same math (for self-check)."""
    src = edge_index[0]
    dst = edge_index[1]
    edge_emb = edge_attr @ params["we"] + params["be"]
    msg = jnp.maximum(x_cat[src] + edge_emb, 0.0)
    aggr = jax.ops.segment_sum(msg, dst, num_segments=x_cat.shape[0])
    h = (1.0 + EPS) * x_cat + aggr
    z = jnp.maximum(h @ params["w1"] + params["b1"], 0.0)
    return z @ params["w2"] + params["b2"]


def _init_params(key):
    ks = jax.random.split(key, 6)
    scale = 0.05
    return {
        # GINEConv edge projection: torch Linear(1, F_IN) -> stored as [1, F_IN]
        "we": scale * jax.random.normal(ks[0], (1, F_IN), jnp.float32),
        "be": scale * jax.random.normal(ks[1], (1, F_IN), jnp.float32),
        # MLP: Linear(F_IN, HIDDEN) -> stored as [F_IN, HIDDEN]
        "w1": scale * jax.random.normal(ks[2], (F_IN, HIDDEN_DIM), jnp.float32),
        "b1": scale * jax.random.normal(ks[3], (1, HIDDEN_DIM), jnp.float32),
        # MLP: Linear(HIDDEN, EMBED) -> stored as [HIDDEN, EMBED]
        "w2": scale * jax.random.normal(ks[4], (HIDDEN_DIM, EMBED_DIM), jnp.float32),
        "b2": scale * jax.random.normal(ks[5], (1, EMBED_DIM), jnp.float32),
    }


if __name__ == "__main__":
    root = jax.random.PRNGKey(0)
    k_x, k_ei, k_ea, k_params, k_rs = jax.random.split(root, 5)

    # data['x'], data['edge_index'], data['edge_attr']
    x = jax.random.normal(k_x, (N_NODES, INIT_DIM), jnp.float32)
    edge_index = jax.random.randint(k_ei, (2, N_EDGES), 0, N_NODES, dtype=jnp.int32)
    edge_attr = jax.random.normal(k_ea, (N_EDGES, 1), jnp.float32)
    # RandomSignal draw (outside the kernel, like np.random.randn in the torch module).
    signal = jax.random.normal(k_rs, (N_NODES, RANDOM_SIGNAL_DIM), jnp.float32)

    params = _init_params(k_params)
    w_slab, webe = pack_params(params)     # packed once, reused every call

    embed = model3d_forward(x, edge_index, edge_attr, signal, w_slab, webe)
    embed = jax.block_until_ready(embed)

    # Non-circular check: reference builds x_cat and the whole GNN independently.
    x_cat = jnp.concatenate([x, signal], axis=1)
    ref = _reference_forward(x_cat, edge_index, edge_attr, params)
    assert embed.shape == (N_NODES, EMBED_DIM)
    assert jnp.allclose(embed, ref, atol=1e-4, rtol=1e-4), "Pallas output mismatch vs reference"

    print("KERNEL_OK")
</pallas_src>

<mosaic_0001>
module attributes {stable_mosaic.version = 11 : i64} {
  func.func @_gine_kernel(%arg0: memref<83x64xf32, #tpu.memory_space<vmem>>, %arg1: memref<138x128xf32, #tpu.memory_space<vmem>>, %arg2: memref<16x128xf32, #tpu.memory_space<vmem>>) attributes {dimension_semantics = [], scalar_prefetch = 0 : i64, scratch_operands = 0 : i64, tpu.core_type = #tpu.core_type<tc>} {
    %c0 = arith.constant 0 : index
    %c0_0 = arith.constant 0 : index
    %0 = vector.load %arg0[%c0, %c0_0] : memref<83x64xf32, #tpu.memory_space<vmem>>, vector<83x64xf32>
    %c0_1 = arith.constant 0 : index
    %c0_2 = arith.constant 0 : index
    %1 = vector.load %arg1[%c0_1, %c0_2] : memref<138x128xf32, #tpu.memory_space<vmem>>, vector<138x128xf32>
    %2 = vector.extract_strided_slice %0 {offsets = [0, 0], sizes = [16, 8], strides = [1, 1]} : vector<83x64xf32> to vector<16x8xf32>
    %3 = vector.extract_strided_slice %0 {offsets = [0, 0], sizes = [18, 8], strides = [1, 1]} : vector<83x64xf32> to vector<18x8xf32>
    %4 = vector.extract_strided_slice %0 {offsets = [18, 0], sizes = [1, 64], strides = [1, 1]} : vector<83x64xf32> to vector<1x64xf32>
    %5 = arith.fptosi %4 : vector<1x64xf32> to vector<1x64xi32>
    %6 = vector.extract_strided_slice %0 {offsets = [19, 0], sizes = [64, 1], strides = [1, 1]} : vector<83x64xf32> to vector<64x1xf32>
    %7 = arith.fptosi %6 : vector<64x1xf32> to vector<64x1xi32>
    %8 = vector.extract_strided_slice %0 {offsets = [19, 1], sizes = [64, 1], strides = [1, 1]} : vector<83x64xf32> to vector<64x1xf32>
    %9 = tpu.iota {dimensions = array<i32: 1>} : vector<64x18xi32>
    %10 = vector.broadcast %7 : vector<64x1xi32> to vector<64x18xi32>
    %11 = arith.cmpi eq, %9, %10 : vector<64x18xi32>
    %12 = arith.extui %11 : vector<64x18xi1> to vector<64x18xi32>
    %13 = arith.sitofp %12 : vector<64x18xi32> to vector<64x18xf32>
    %c16_i32 = arith.constant 16 : i32
    %14 = vector.broadcast %c16_i32 : i32 to vector<64x18xi32>
    %15 = arith.cmpi slt, %9, %14 : vector<64x18xi32>
    %c16_i32_3 = arith.constant 16 : i32
    %16 = vector.broadcast %c16_i32_3 : i32 to vector<64x18xi32>
    %17 = arith.cmpi eq, %9, %16 : vector<64x18xi32>
    %cst = arith.constant 1.000000e+00 : f32
    %18 = vector.shape_cast %8 : vector<64x1xf32> to vector<64x1xf32>
    %19 = vector.broadcast %18 : vector<64x1xf32> to vector<64x18xf32>
    %20 = vector.broadcast %cst : f32 to vector<64x18xf32>
    %21 = arith.select %17, %19, %20 : vector<64x18xi1>, vector<64x18xf32>
    %22 = arith.select %15, %13, %21 : vector<64x18xi1>, vector<64x18xf32>
    %cst_4 = arith.constant dense<0.000000e+00> : vector<64x8xf32>
    %23 = tpu.matmul %22, %3, %cst_4 {dimension_numbers = #tpu.dot_dimension_numbers<[1], [0], [0], [1], [0, 0, 1, 1], [], []>} : vector<64x18xf32>, vector<18x8xf32>, vector<64x8xf32> -> vector<64x8xf32>
    %cst_5 = arith.constant 0.000000e+00 : f32
    %24 = vector.broadcast %cst_5 : f32 to vector<64x8xf32>
    %25 = arith.maximumf %23, %24 : vector<64x8xf32>
    %26 = tpu.iota {dimensions = array<i32: 0>} : vector<16x64xi32>
    %27 = vector.broadcast %5 : vector<1x64xi32> to vector<16x64xi32>
    %28 = arith.cmpi eq, %26, %27 : vector<16x64xi32>
    %29 = arith.extui %28 : vector<16x64xi1> to vector<16x64xi32>
    %30 = arith.sitofp %29 : vector<16x64xi32> to vector<16x64xf32>
    %cst_6 = arith.constant dense<0.000000e+00> : vector<16x8xf32>
    %31 = tpu.matmul %30, %25, %cst_6 {dimension_numbers = #tpu.dot_dimension_numbers<[1], [0], [0], [1], [0, 0, 1, 1], [], []>} : vector<16x64xf32>, vector<64x8xf32>, vector<16x8xf32> -> vector<16x8xf32>
    %cst_7 = arith.constant 1.000000e+00 : f32
    %32 = vector.broadcast %cst_7 : f32 to vector<16x8xf32>
    %33 = arith.mulf %32, %2 : vector<16x8xf32>
    %34 = arith.addf %33, %31 : vector<16x8xf32>
    %35 = vector.extract_strided_slice %1 {offsets = [0, 0], sizes = [8, 128], strides = [1, 1]} : vector<138x128xf32> to vector<8x128xf32>
    %36 = vector.extract_strided_slice %1 {offsets = [8, 0], sizes = [1, 128], strides = [1, 1]} : vector<138x128xf32> to vector<1x128xf32>
    %cst_8 = arith.constant dense<0.000000e+00> : vector<16x128xf32>
    %37 = tpu.matmul %34, %35, %cst_8 {dimension_numbers = #tpu.dot_dimension_numbers<[1], [0], [0], [1], [0, 0, 1, 1], [], []>} : vector<16x8xf32>, vector<8x128xf32>, vector<16x128xf32> -> vector<16x128xf32>
    %38 = vector.broadcast %36 : vector<1x128xf32> to vector<16x128xf32>
    %39 = arith.addf %37, %38 : vector<16x128xf32>
    %cst_9 = arith.constant 0.000000e+00 : f32
    %40 = vector.broadcast %cst_9 : f32 to vector<16x128xf32>
    %41 = arith.maximumf %39, %40 : vector<16x128xf32>
    %42 = vector.extract_strided_slice %1 {offsets = [9, 0], sizes = [128, 128], strides = [1, 1]} : vector<138x128xf32> to vector<128x128xf32>
    %43 = vector.extract_strided_slice %1 {offsets = [137, 0], sizes = [1, 128], strides = [1, 1]} : vector<138x128xf32> to vector<1x128xf32>
    %cst_10 = arith.constant dense<0.000000e+00> : vector<16x128xf32>
    %44 = tpu.matmul %41, %42, %cst_10 {dimension_numbers = #tpu.dot_dimension_numbers<[1], [0], [0], [1], [0, 0, 1, 1], [], []>} : vector<16x128xf32>, vector<128x128xf32>, vector<16x128xf32> -> vector<16x128xf32>
    %45 = vector.broadcast %43 : vector<1x128xf32> to vector<16x128xf32>
    %46 = arith.addf %44, %45 : vector<16x128xf32>
    %c0_11 = arith.constant 0 : index
    %c0_12 = arith.constant 0 : index
    %47 = vector.load %arg2[%c0_11, %c0_12] : memref<16x128xf32, #tpu.memory_space<vmem>>, vector<16x128xf32>
    tpu.vector_store %arg2[%c0_11, %c0_12], %46 {strides = array<i32>} : memref<16x128xf32, #tpu.memory_space<vmem>>, vector<16x128xf32>,
    return
  }
}

</mosaic_0001>

<llo_original>
// kernel: model3d_forward.1
$region0: #{model3d_forward.1}
  #allocation0 [shape = 'u32[]', space=smem, size = 0x4, offset = 0x4, fixed_abs, tag = 'smem constant byte address 0x4 - core index']
  #allocation1 [shape = 'u32[144,128]{1,0:T(1,128)}', space=vmem, size = 0x12000, scoped, tag = 'internal scratch']
  %s0 = inlined_call_operand.vmem [shape: f32[83,64], index: 0, kind: input, shape index: {}]
  %s1 = inlined_call_operand.vmem [shape: f32[138,128], index: 1, kind: input, shape index: {}]
  %s2 = inlined_call_operand.hbm [shape: f32[16,128], index: 2, kind: output, shape index: {}]
  %s3 = sld [smem:[#allocation0]]
  $region18: #{model3d_forward.1} parent=0
    _
  %s5 = ssub.s32 1, %s3
  %s6 = scalar_select 0, %s5, %s3
  $region1: #{model3d_forward.1} parent=0
    #allocation2 [shape = 'u8[8192]{0}', space=vmem, size = 0x2000, scoped, tag = 'output window, operand 0, single buffered']
    #allocation3 [shape = 's32[1]{0}', space=sflag, size = 0x4, scoped, tag = 'scoped memory for model3d_forward.1']
    %7 = vsyncpa [#allocation3], 0
    // Predicated region
    $region2: #{model3d_forward.1} parent=1 // pred_check
      _
    $region3: #{model3d_forward.1} parent=1 // pred_check_branch
      %9 = sbr.rel (0) target = $region5
    $region4: #{model3d_forward.1} parent=1 // pred_region
      _
    $region5: #{model3d_forward.1} parent=1 // pred_fallthru
      _
    // Predicated region
    $region6: #{model3d_forward.1} parent=1 // pred_check
      _
    $region7: #{model3d_forward.1} parent=1 // pred_check_branch
      %11 = sbr.rel (0) target = $region9
    $region8: #{model3d_forward.1} parent=1 // pred_region
      _
    $region9: #{model3d_forward.1} parent=1 // pred_fallthru
      _
    %v12 = vld [vmem:[%s0] sm:$0xff]
    %v13 = vld [vmem:[%s0 + $0x8] sm:$0xff]
    %v14 = vld [vmem:[%s0 + $0x10] sm:$0xff]
    %v15 = vld [vmem:[%s0 + $0x18] sm:$0xff]
    %v16 = vld [vmem:[%s0 + $0x20] sm:$0xff]
    %v17 = vld [vmem:[%s0 + $0x28] sm:$0xff]
    %v18 = vld [vmem:[%s0 + $0x30] sm:$0xff]
    %v19 = vld [vmem:[%s0 + $0x38] sm:$0xff]
    %v20 = vld [vmem:[%s0 + $0x40] sm:$0xff]
    %v21 = vld [vmem:[%s0 + $0x48] sm:$0xff]
    %v22 = vld [vmem:[%s0 + $0x50] sm:$0x7]
    %v23 = vld [vmem:[%s1] sm:$0xff]
    %v24 = vld [vmem:[%s1 + $0x8] sm:$0xff]
    %v25 = vld [vmem:[%s1 + $0x10] sm:$0xff]
    %v26 = vld [vmem:[%s1 + $0x18] sm:$0xff]
    %v27 = vld [vmem:[%s1 + $0x20] sm:$0xff]
    %v28 = vld [vmem:[%s1 + $0x28] sm:$0xff]
    %v29 = vld [vmem:[%s1 + $0x30] sm:$0xff]
    %v30 = vld [vmem:[%s1 + $0x38] sm:$0xff]
    %v31 = vld [vmem:[%s1 + $0x40] sm:$0xff]
    %v32 = vld [vmem:[%s1 + $0x48] sm:$0xff]
    %v33 = vld [vmem:[%s1 + $0x50] sm:$0xff]
    %v34 = vld [vmem:[%s1 + $0x58] sm:$0xff]
    %v35 = vld [vmem:[%s1 + $0x60] sm:$0xff]
    %v36 = vld [vmem:[%s1 + $0x68] sm:$0xff]
    %v37 = vld [vmem:[%s1 + $0x70] sm:$0xff]
    %v38 = vld [vmem:[%s1 + $0x78] sm:$0xff]
    %v39 = vld [vmem:[%s1 + $0x80] sm:$0xff]
    %v40 = vld [vmem:[%s1 + $0x88] sm:$0x3]
    %v41 = vcvt.f32.s32.to.zero.pseudo %v14
    %v42 = vcvt.f32.s32.to.zero.pseudo %v15
    %v43 = vcvt.f32.s32.to.zero.pseudo %v16
    %v44 = vcvt.f32.s32.to.zero.pseudo %v17
    %v45 = vcvt.f32.s32.to.zero.pseudo %v18
    %v46 = vcvt.f32.s32.to.zero.pseudo %v19
    %v47 = vcvt.f32.s32.to.zero.pseudo %v20
    %v48 = vcvt.f32.s32.to.zero.pseudo %v21
    %v49 = vcvt.f32.s32.to.zero.pseudo %v22
    %v50 = vlaneseq
    %v51 = vand.u32 %v50, 127
    %52 = vset.pattern.permute.xlu0 0
    %53 = vperm.xlu0 %52, %v41
    %v54 = vpop.permute.xlu0 %53
    %55 = vset.pattern.permute.xlu0 0
    %56 = vperm.xlu0 %55, %v42
    %v57 = vpop.permute.xlu0 %56
    %58 = vset.pattern.permute.xlu0 0
    %59 = vperm.xlu0 %58, %v43
    %v60 = vpop.permute.xlu0 %59
    %61 = vset.pattern.permute.xlu0 0
    %62 = vperm.xlu0 %61, %v44
    %v63 = vpop.permute.xlu0 %62
    %64 = vset.pattern.permute.xlu0 0
    %65 = vperm.xlu0 %64, %v45
    %v66 = vpop.permute.xlu0 %65
    %67 = vset.pattern.permute.xlu0 0
    %68 = vperm.xlu0 %67, %v46
    %v69 = vpop.permute.xlu0 %68
    %70 = vset.pattern.permute.xlu0 0
    %71 = vperm.xlu0 %70, %v47
    %v72 = vpop.permute.xlu0 %71
    %73 = vset.pattern.permute.xlu0 0
    %74 = vperm.xlu0 %73, %v48
    %v75 = vpop.permute.xlu0 %74
    %76 = vset.pattern.permute.xlu0 0
    %77 = vperm.xlu0 %76, %v49
    %v78 = vpop.permute.xlu0 %77
    %vm79 = vcmp.eq.s32.totalorder %v51, %v54
    %vm80 = vcmp.eq.s32.totalorder %v51, %v57
    %vm81 = vcmp.eq.s32.totalorder %v51, %v60
    %vm82 = vcmp.eq.s32.totalorder %v51, %v63
    %vm83 = vcmp.eq.s32.totalorder %v51, %v66
    %vm84 = vcmp.eq.s32.totalorder %v51, %v69
    %vm85 = vcmp.eq.s32.totalorder %v51, %v72
    %vm86 = vcmp.eq.s32.totalorder %v51, %v75
    %vm87 = vcmp.eq.s32.totalorder %v51, %v78
    %v88 = vsel %vm79, 1, 0
    %v89 = vsel %vm80, 1, 0
    %v90 = vsel %vm81, 1, 0
    %v91 = vsel %vm82, 1, 0
    %v92 = vsel %vm83, 1, 0
    %v93 = vsel %vm84, 1, 0
    %v94 = vsel %vm85, 1, 0
    %v95 = vsel %vm86, 1, 0
    %v96 = vsel %vm87, 1, 0
    %v97 = vcvt.s32.f32 %v88
    %v98 = vcvt.s32.f32 %v89
    %v99 = vcvt.s32.f32 %v90
    %v100 = vcvt.s32.f32 %v91
    %v101 = vcvt.s32.f32 %v92
    %v102 = vcvt.s32.f32 %v93
    %v103 = vcvt.s32.f32 %v94
    %v104 = vcvt.s32.f32 %v95
    %v105 = vcvt.s32.f32 %v96
    %vm106 = vcmp.lt.s32.totalorder %v51, 16
    %vm107 = vcmp.eq.s32.totalorder %v51, 16
    %109 = vset.pattern.permute.xlu0 1
    %110 = vperm.xlu0 %109, %v14
    %v111 = vpop.permute.xlu0 %110
    %114 = vset.pattern.permute.xlu0 1
    %115 = vperm.xlu0 %114, %v15
    %v116 = vpop.permute.xlu0 %115
    %119 = vset.pattern.permute.xlu0 1
    %120 = vperm.xlu0 %119, %v16
    %v121 = vpop.permute.xlu0 %120
    %124 = vset.pattern.permute.xlu0 1
    %125 = vperm.xlu0 %124, %v17
    %v126 = vpop.permute.xlu0 %125
    %129 = vset.pattern.permute.xlu0 1
    %130 = vperm.xlu0 %129, %v18
    %v131 = vpop.permute.xlu0 %130
    %134 = vset.pattern.permute.xlu0 1
    %135 = vperm.xlu0 %134, %v19
    %v136 = vpop.permute.xlu0 %135
    %139 = vset.pattern.permute.xlu0 1
    %140 = vperm.xlu0 %139, %v20
    %v141 = vpop.permute.xlu0 %140
    %144 = vset.pattern.permute.xlu0 1
    %145 = vperm.xlu0 %144, %v21
    %v146 = vpop.permute.xlu0 %145
    %149 = vset.pattern.permute.xlu0 1
    %150 = vperm.xlu0 %149, %v22
    %v151 = vpop.permute.xlu0 %150
    %v153 = vsel %vm107, %v111, 1.0
    %v154 = vsel %vm107, %v116, 1.0
    %v155 = vsel %vm107, %v121, 1.0
    %v156 = vsel %vm107, %v126, 1.0
    %v157 = vsel %vm107, %v131, 1.0
    %v158 = vsel %vm107, %v136, 1.0
    %v159 = vsel %vm107, %v141, 1.0
    %v160 = vsel %vm107, %v146, 1.0
    %v161 = vsel %vm107, %v151, 1.0
    %v162 = vsel %vm106, %v97, %v153
    %v163 = vsel %vm106, %v98, %v154
    %v164 = vsel %vm106, %v99, %v155
    %v165 = vsel %vm106, %v100, %v156
    %v166 = vsel %vm106, %v101, %v157
    %v167 = vsel %vm106, %v102, %v158
    %v168 = vsel %vm106, %v103, %v159
    %v169 = vsel %vm106, %v104, %v160
    %v170 = vsel %vm106, %v105, %v161
    %vm180 = vcmask 1044480
    %v181 = vrot.slane %v162, 3
    %v182 = vrot.slane %v163, 3
    %v183 = vsel %vm180, %v181, %v182
    %v184 = vrot.slane %v164, 3
    %v185 = vsel %vm180, %v182, %v184
    %v186 = vrot.slane %v165, 3
    %v187 = vsel %vm180, %v184, %v186
    %v188 = vrot.slane %v166, 3
    %v189 = vsel %vm180, %v186, %v188
    %v190 = vrot.slane %v167, 3
    %v191 = vsel %vm180, %v188, %v190
    %v192 = vrot.slane %v168, 3
    %v193 = vsel %vm180, %v190, %v192
    %v194 = vrot.slane %v169, 3
    %v195 = vsel %vm180, %v192, %v194
    %v196 = vrot.slane %v170, 3
    %v197 = vsel %vm180, %v194, %v196
    %vm198 = vcmask 146432
    %v199 = vsel %vm198, %v183, 0
    %v201 = vsel %vm198, %v185, 0
    %v203 = vsel %vm198, %v187, 0
    %v205 = vsel %vm198, %v189, 0
    %v207 = vsel %vm198, %v191, 0
    %v209 = vsel %vm198, %v193, 0
    %v211 = vsel %vm198, %v195, 0
    %v213 = vsel %vm198, %v197, 0
    %vm215 = vcmask 1041408
    %v216 = vsel %vm215, %v14, 0
    %218 = vmatprep.subr.mxu0 0.0
    %219 = vmatpush1.msra.mxu0 %v12
    %220 = vmatprep.subr.mxu0 0.0
    %221 = vmatpush1.msra.mxu0 %v13
    %222 = vmatprep.subr.mxu0 0.0
    %223 = vmatpush1.msra.mxu0 %v216
    %224 = vmatprep.subr.mxu0 0.0
    %225 = vmatpush1.msra.mxu0 0.0
    %226 = vmatprep.subr.mxu0 0.0
    %227 = vmatpush1.msra.mxu0 0.0
    %228 = vmatprep.subr.mxu0 0.0
    %229 = vmatpush1.msra.mxu0 0.0
    %230 = vmatprep.subr.mxu0 0.0
    %231 = vmatpush1.msra.mxu0 0.0
    %232 = vmatprep.subr.mxu0 0.0
    %233 = vmatpush1.msra.mxu0 0.0
    %234 = vmatprep.subr.mxu0 0.0
    %235 = vmatpush1.msra.mxu0 0.0
    %236 = vmatprep.subr.mxu0 0.0
    %237 = vmatpush1.msra.mxu0 0.0
    %238 = vmatprep.subr.mxu0 0.0
    %239 = vmatpush1.msra.mxu0 0.0
    %240 = vmatprep.subr.mxu0 0.0
    %241 = vmatpush1.msra.mxu0 0.0
    %242 = vmatprep.subr.mxu0 0.0
    %243 = vmatpush1.msra.mxu0 0.0
    %244 = vmatprep.subr.mxu0 0.0
    %245 = vmatpush1.msra.mxu0 0.0
    %246 = vmatprep.subr.mxu0 0.0
    %247 = vmatpush1.msra.mxu0 0.0
    %248 = vmatprep.subr.mxu0 0.0
    %249 = vmatpush1.msra.mxu0 0.0
    %250 = vmatprep.subr.mxu0 0.0
    %251 = vmatpush1.msra.mxu0 0.0
    %252 = vmatprep.subr.mxu0 0.0
    %253 = vmatpush1.msra.mxu0 0.0
    %254 = vmatprep.subr.mxu0 0.0
    %255 = vmatpush1.msra.mxu0 0.0
    %256 = vmatprep.subr.mxu0 0.0
    %257 = vmatpush1.msra.mxu0 0.0
    %258 = vmatprep.subr.mxu0 0.0
    %259 = vmatpush1.msra.mxu0 0.0
    %260 = vmatprep.subr.mxu0 0.0
    %261 = vmatpush1.msra.mxu0 0.0
    %262 = vmatprep.subr.mxu0 0.0
    %263 = vmatpush1.msra.mxu0 0.0
    %264 = vmatprep.subr.mxu0 0.0
    %265 = vmatpush1.msra.mxu0 0.0
    %266 = vmatprep.subr.mxu0 0.0
    %267 = vmatpush1.msra.mxu0 0.0
    %268 = vmatprep.subr.mxu0 0.0
    %269 = vmatpush1.msra.mxu0 0.0
    %270 = vmatprep.subr.mxu0 0.0
    %271 = vmatpush1.msra.mxu0 0.0
    %272 = vmatprep.subr.mxu0 0.0
    %273 = vmatpush1.msra.mxu0 0.0
    %274 = vmatprep.subr.mxu0 0.0
    %275 = vmatpush1.msra.mxu0 0.0
    %276 = vmatprep.subr.mxu0 0.0
    %277 = vmatpush1.msra.mxu0 0.0
    %278 = vmatprep.subr.mxu0 0.0
    %279 = vmatpush1.msra.mxu0 0.0
    %280 = vmatprep.subr.mxu0 0.0
    %281 = vmatpush1.msra.mxu0 0.0
    %282 = vmatprep.mubr.f32.mxu0 0.0
    %283 = vmatmul.mubr.f32.gmra.mrb[0].mxu0 %v199
    %v284 = vpop.f32.mrb[0].mxu0
    %v285 = vadd.f32 0.0, %v284
    %v286 = vpop.f32.mrb[0].mxu0
    %287 = vmatprep.mubr.f32.mxu0 0.0
    %288 = vmatmul.mubr.f32.gmra.mrb[0].mxu0 %v201
    %v289 = vpop.f32.mrb[0].mxu0
    %v290 = vadd.f32 0.0, %v289
    %v291 = vpop.f32.mrb[0].mxu0
    %292 = vmatprep.mubr.f32.mxu0 0.0
    %293 = vmatmul.mubr.f32.gmra.mrb[0].mxu0 %v203
    %v294 = vpop.f32.mrb[0].mxu0
    %v295 = vadd.f32 0.0, %v294
    %v296 = vpop.f32.mrb[0].mxu0
    %297 = vmatprep.mubr.f32.mxu0 0.0
    %298 = vmatmul.mubr.f32.gmra.mrb[0].mxu0 %v205
    %v299 = vpop.f32.mrb[0].mxu0
    %v300 = vadd.f32 0.0, %v299
    %v301 = vpop.f32.mrb[0].mxu0
    %302 = vmatprep.mubr.f32.mxu0 0.0
    %303 = vmatmul.mubr.f32.gmra.mrb[0].mxu0 %v207
    %v304 = vpop.f32.mrb[0].mxu0
    %v305 = vadd.f32 0.0, %v304
    %v306 = vpop.f32.mrb[0].mxu0
    %307 = vmatprep.mubr.f32.mxu0 0.0
    %308 = vmatmul.mubr.f32.gmra.mrb[0].mxu0 %v209
    %v309 = vpop.f32.mrb[0].mxu0
    %v310 = vadd.f32 0.0, %v309
    %v311 = vpop.f32.mrb[0].mxu0
    %312 = vmatprep.mubr.f32.mxu0 0.0
    %313 = vmatmul.mubr.f32.gmra.mrb[0].mxu0 %v211
    %v314 = vpop.f32.mrb[0].mxu0
    %v315 = vadd.f32 0.0, %v314
    %v316 = vpop.f32.mrb[0].mxu0
    %317 = vmatprep.mubr.f32.mxu0 0.0
    %318 = vmatmul.mubr.f32.gmra.mrb[0].mxu0 %v213
    %v319 = vpop.f32.mrb[0].mxu0
    %v320 = vadd.f32 0.0, %v319
    %v321 = vpop.f32.mrb[0].mxu0
    %322 = vdwg.mxu0
    %v323 = vmax.f32 %v285, 0.0
    %v324 = vmax.f32 %v290, 0.0
    %v325 = vmax.f32 %v295, 0.0
    %v326 = vmax.f32 %v300, 0.0
    %v327 = vmax.f32 %v305, 0.0
    %v328 = vmax.f32 %v310, 0.0
    %v329 = vmax.f32 %v315, 0.0
    %v330 = vmax.f32 %v320, 0.0
    %v331 = vlaneseq
    %v332 = vshrl.u32 %v331, 7
    %v333 = vadd.s32 %v332, 8
    %v334 = vlaneseq
    %v335 = vshrl.u32 %v334, 7
    %v336 = vsub.s32 2, %v335
    %v337 = vrot.slane %v41, %v336
    %vm338 = vcmp.eq.s32.totalorder %v332, %v337
    %vm339 = vcmp.eq.s32.totalorder %v333, %v337
    %v340 = vsel %vm338, 1, 0
    %v341 = vsel %vm339, 1, 0
    %v342 = vcvt.s32.f32 %v340
    %v343 = vcvt.s32.f32 %v341
    %vm344 = vcmask 523264
    %v346 = vsel %vm344, %v342, 0
    %v349 = vsel %vm344, %v343, 0
    %351 = vmatprep.subr.mxu0 0.0
    %352 = vmatpush1.msra.mxu0 %v323
    %353 = vmatprep.subr.mxu0 0.0
    %354 = vmatpush1.msra.mxu0 %v324
    %355 = vmatprep.subr.mxu0 0.0
    %356 = vmatpush1.msra.mxu0 %v325
    %357 = vmatprep.subr.mxu0 0.0
    %358 = vmatpush1.msra.mxu0 %v326
    %359 = vmatprep.subr.mxu0 0.0
    %360 = vmatpush1.msra.mxu0 %v327
    %361 = vmatprep.subr.mxu0 0.0
    %362 = vmatpush1.msra.mxu0 %v328
    %363 = vmatprep.subr.mxu0 0.0
    %364 = vmatpush1.msra.mxu0 %v329
    %365 = vmatprep.subr.mxu0 0.0
    %366 = vmatpush1.msra.mxu0 %v330
    %367 = vmatprep.subr.mxu0 0.0
    %368 = vmatpush1.msra.mxu0 0.0
    %369 = vmatprep.subr.mxu0 0.0
    %370 = vmatpush1.msra.mxu0 0.0
    %371 = vmatprep.subr.mxu0 0.0
    %372 = vmatpush1.msra.mxu0 0.0
    %373 = vmatprep.subr.mxu0 0.0
    %374 = vmatpush1.msra.mxu0 0.0
    %375 = vmatprep.subr.mxu0 0.0
    %376 = vmatpush1.msra.mxu0 0.0
    %377 = vmatprep.subr.mxu0 0.0
    %378 = vmatpush1.msra.mxu0 0.0
    %379 = vmatprep.subr.mxu0 0.0
    %380 = vmatpush1.msra.mxu0 0.0
    %381 = vmatprep.subr.mxu0 0.0
    %382 = vmatpush1.msra.mxu0 0.0
    %383 = vmatprep.subr.mxu0 0.0
    %384 = vmatpush1.msra.mxu0 0.0
    %385 = vmatprep.subr.mxu0 0.0
    %386 = vmatpush1.msra.mxu0 0.0
    %387 = vmatprep.subr.mxu0 0.0
    %388 = vmatpush1.msra.mxu0 0.0
    %389 = vmatprep.subr.mxu0 0.0
    %390 = vmatpush1.msra.mxu0 0.0
    %391 = vmatprep.subr.mxu0 0.0
    %392 = vmatpush1.msra.mxu0 0.0
    %393 = vmatprep.subr.mxu0 0.0
    %394 = vmatpush1.msra.mxu0 0.0
    %395 = vmatprep.subr.mxu0 0.0
    %396 = vmatpush1.msra.mxu0 0.0
    %397 = vmatprep.subr.mxu0 0.0
    %398 = vmatpush1.msra.mxu0 0.0
    %399 = vmatprep.subr.mxu0 0.0
    %400 = vmatpush1.msra.mxu0 0.0
    %401 = vmatprep.subr.mxu0 0.0
    %402 = vmatpush1.msra.mxu0 0.0
    %403 = vmatprep.subr.mxu0 0.0
    %404 = vmatpush1.msra.mxu0 0.0
    %405 = vmatprep.subr.mxu0 0.0
    %406 = vmatpush1.msra.mxu0 0.0
    %407 = vmatprep.subr.mxu0 0.0
    %408 = vmatpush1.msra.mxu0 0.0
    %409 = vmatprep.subr.mxu0 0.0
    %410 = vmatpush1.msra.mxu0 0.0
    %411 = vmatprep.subr.mxu0 0.0
    %412 = vmatpush1.msra.mxu0 0.0
    %413 = vmatprep.subr.mxu0 0.0
    %414 = vmatpush1.msra.mxu0 0.0
    %415 = vmatprep.mubr.f32.mxu0 0.0
    %416 = vmatmul.mubr.f32.gmra.mrb[0].mxu0 %v346
    %v417 = vpop.f32.mrb[0].mxu0
    %v418 = vadd.f32 0.0, %v417
    %v419 = vpop.f32.mrb[0].mxu0
    %420 = vmatprep.mubr.f32.mxu0 0.0
    %421 = vmatmul.mubr.f32.gmra.mrb[0].mxu0 %v349
    %v422 = vpop.f32.mrb[0].mxu0
    %v423 = vadd.f32 0.0, %v422
    %v424 = vpop.f32.mrb[0].mxu0
    %425 = vdwg.mxu0
    %v426 = vadd.f32 %v12, %v418
    %v427 = vadd.f32 %v13, %v423
    %v428 = vlaneseq
    %v429 = vshrl.u32 %v428, 7
    %v430 = vsub.s32 0, %v429
    %v431 = vrot.slane %v24, %v430
    %vm432 = vcmask 64512
    %v434 = vsel %vm432, %v426, 0
    %v437 = vsel %vm432, %v427, 0
    %439 = vmatprep.subr.mxu0 0.0
    %440 = vmatpush1.msra.mxu0 %v23
    %441 = vmatprep.subr.mxu0 0.0
    %442 = vmatpush1.msra.mxu0 0.0
    %443 = vmatprep.subr.mxu0 0.0
    %444 = vmatpush1.msra.mxu0 0.0
    %445 = vmatprep.subr.mxu0 0.0
    %446 = vmatpush1.msra.mxu0 0.0
    %447 = vmatprep.subr.mxu0 0.0
    %448 = vmatpush1.msra.mxu0 0.0
    %449 = vmatprep.subr.mxu0 0.0
    %450 = vmatpush1.msra.mxu0 0.0
    %451 = vmatprep.subr.mxu0 0.0
    %452 = vmatpush1.msra.mxu0 0.0
    %453 = vmatprep.subr.mxu0 0.0
    %454 = vmatpush1.msra.mxu0 0.0
    %455 = vmatprep.subr.mxu0 0.0
    %456 = vmatpush1.msra.mxu0 0.0
    %457 = vmatprep.subr.mxu0 0.0
    %458 = vmatpush1.msra.mxu0 0.0
    %459 = vmatprep.subr.mxu0 0.0
    %460 = vmatpush1.msra.mxu0 0.0
    %461 = vmatprep.subr.mxu0 0.0
    %462 = vmatpush1.msra.mxu0 0.0
    %463 = vmatprep.subr.mxu0 0.0
    %464 = vmatpush1.msra.mxu0 0.0
    %465 = vmatprep.subr.mxu0 0.0
    %466 = vmatpush1.msra.mxu0 0.0
    %467 = vmatprep.subr.mxu0 0.0
    %468 = vmatpush1.msra.mxu0 0.0
    %469 = vmatprep.subr.mxu0 0.0
    %470 = vmatpush1.msra.mxu0 0.0
    %471 = vmatprep.subr.mxu0 0.0
    %472 = vmatpush1.msra.mxu0 0.0
    %473 = vmatprep.subr.mxu0 0.0
    %474 = vmatpush1.msra.mxu0 0.0
    %475 = vmatprep.subr.mxu0 0.0
    %476 = vmatpush1.msra.mxu0 0.0
    %477 = vmatprep.subr.mxu0 0.0
    %478 = vmatpush1.msra.mxu0 0.0
    %479 = vmatprep.subr.mxu0 0.0
    %480 = vmatpush1.msra.mxu0 0.0
    %481 = vmatprep.subr.mxu0 0.0
    %482 = vmatpush1.msra.mxu0 0.0
    %483 = vmatprep.subr.mxu0 0.0
    %484 = vmatpush1.msra.mxu0 0.0
    %485 = vmatprep.subr.mxu0 0.0
    %486 = vmatpush1.msra.mxu0 0.0
    %487 = vmatprep.subr.mxu0 0.0
    %488 = vmatpush1.msra.mxu0 0.0
    %489 = vmatprep.subr.mxu0 0.0
    %490 = vmatpush1.msra.mxu0 0.0
    %491 = vmatprep.subr.mxu0 0.0
    %492 = vmatpush1.msra.mxu0 0.0
    %493 = vmatprep.subr.mxu0 0.0
    %494 = vmatpush1.msra.mxu0 0.0
    %495 = vmatprep.subr.mxu0 0.0
    %496 = vmatpush1.msra.mxu0 0.0
    %497 = vmatprep.subr.mxu0 0.0
    %498 = vmatpush1.msra.mxu0 0.0
    %499 = vmatprep.subr.mxu0 0.0
    %500 = vmatpush1.msra.mxu0 0.0
    %501 = vmatprep.subr.mxu0 0.0
    %502 = vmatpush1.msra.mxu0 0.0
    %503 = vmatprep.mubr.f32.mxu0 0.0
    %504 = vmatmul.mubr.f32.gmra.mrb[0].mxu0 %v434
    %v505 = vpop.f32.mrb[0].mxu0
    %v506 = vadd.f32 %v431, %v505
    %v507 = vpop.f32.mrb[0].mxu0
    %508 = vmatprep.mubr.f32.mxu0 0.0
    %509 = vmatmul.mubr.f32.gmra.mrb[0].mxu0 %v437
    %v510 = vpop.f32.mrb[0].mxu0
    %v511 = vadd.f32 %v431, %v510
    %v512 = vpop.f32.mrb[0].mxu0
    %513 = vdwg.mxu0
    %v514 = vmax.f32 %v506, 0.0
    %v515 = vmax.f32 %v511, 0.0
    %v516 = vlaneseq
    %v517 = vshrl.u32 %v516, 7
    %v518 = vsub.s32 1, %v517
    %v519 = vrot.slane %v40, %v518
    %vm537 = vcmask 1046528
    %v538 = vrot.slane %v24, 1
    %v539 = vrot.slane %v25, 1
    %v540 = vsel %vm537, %v538, %v539
    %v541 = vrot.slane %v26, 1
    %v542 = vsel %vm537, %v539, %v541
    %v543 = vrot.slane %v27, 1
    %v544 = vsel %vm537, %v541, %v543
    %v545 = vrot.slane %v28, 1
    %v546 = vsel %vm537, %v543, %v545
    %v547 = vrot.slane %v29, 1
    %v548 = vsel %vm537, %v545, %v547
    %v549 = vrot.slane %v30, 1
    %v550 = vsel %vm537, %v547, %v549
    %v551 = vrot.slane %v31, 1
    %v552 = vsel %vm537, %v549, %v551
    %v553 = vrot.slane %v32, 1
    %v554 = vsel %vm537, %v551, %v553
    %v555 = vrot.slane %v33, 1
    %v556 = vsel %vm537, %v553, %v555
    %v557 = vrot.slane %v34, 1
    %v558 = vsel %vm537, %v555, %v557
    %v559 = vrot.slane %v35, 1
    %v560 = vsel %vm537, %v557, %v559
    %v561 = vrot.slane %v36, 1
    %v562 = vsel %vm537, %v559, %v561
    %v563 = vrot.slane %v37, 1
    %v564 = vsel %vm537, %v561, %v563
    %v565 = vrot.slane %v38, 1
    %v566 = vsel %vm537, %v563, %v565
    %v567 = vrot.slane %v39, 1
    %v568 = vsel %vm537, %v565, %v567
    %v569 = vrot.slane %v40, 1
    %v570 = vsel %vm537, %v567, %v569
    %587 = vmatprep.subr.mxu0 0.0
    %588 = vmatpush1.msra.mxu0 %v540
    %589 = vmatprep.subr.mxu0 0.0
    %590 = vmatpush1.msra.mxu0 %v542
    %591 = vmatprep.subr.mxu0 0.0
    %592 = vmatpush1.msra.mxu0 %v544
    %593 = vmatprep.subr.mxu0 0.0
    %594 = vmatpush1.msra.mxu0 %v546
    %595 = vmatprep.subr.mxu0 0.0
    %596 = vmatpush1.msra.mxu0 %v548
    %597 = vmatprep.subr.mxu0 0.0
    %598 = vmatpush1.msra.mxu0 %v550
    %599 = vmatprep.subr.mxu0 0.0
    %600 = vmatpush1.msra.mxu0 %v552
    %601 = vmatprep.subr.mxu0 0.0
    %602 = vmatpush1.msra.mxu0 %v554
    %603 = vmatprep.subr.mxu0 0.0
    %604 = vmatpush1.msra.mxu0 %v556
    %605 = vmatprep.subr.mxu0 0.0
    %606 = vmatpush1.msra.mxu0 %v558
    %607 = vmatprep.subr.mxu0 0.0
    %608 = vmatpush1.msra.mxu0 %v560
    %609 = vmatprep.subr.mxu0 0.0
    %610 = vmatpush1.msra.mxu0 %v562
    %611 = vmatprep.subr.mxu0 0.0
    %612 = vmatpush1.msra.mxu0 %v564
    %613 = vmatprep.subr.mxu0 0.0
    %614 = vmatpush1.msra.mxu0 %v566
    %615 = vmatprep.subr.mxu0 0.0
    %616 = vmatpush1.msra.mxu0 %v568
    %617 = vmatprep.subr.mxu0 0.0
    %618 = vmatpush1.msra.mxu0 %v570
    %619 = vmatprep.subr.mxu0 0.0
    %620 = vmatpush1.msra.mxu0 0.0
    %621 = vmatprep.subr.mxu0 0.0
    %622 = vmatpush1.msra.mxu0 0.0
    %623 = vmatprep.subr.mxu0 0.0
    %624 = vmatpush1.msra.mxu0 0.0
    %625 = vmatprep.subr.mxu0 0.0
    %626 = vmatpush1.msra.mxu0 0.0
    %627 = vmatprep.subr.mxu0 0.0
    %628 = vmatpush1.msra.mxu0 0.0
    %629 = vmatprep.subr.mxu0 0.0
    %630 = vmatpush1.msra.mxu0 0.0
    %631 = vmatprep.subr.mxu0 0.0
    %632 = vmatpush1.msra.mxu0 0.0
    %633 = vmatprep.subr.mxu0 0.0
    %634 = vmatpush1.msra.mxu0 0.0
    %635 = vmatprep.subr.mxu0 0.0
    %636 = vmatpush1.msra.mxu0 0.0
    %637 = vmatprep.subr.mxu0 0.0
    %638 = vmatpush1.msra.mxu0 0.0
    %639 = vmatprep.subr.mxu0 0.0
    %640 = vmatpush1.msra.mxu0 0.0
    %641 = vmatprep.subr.mxu0 0.0
    %642 = vmatpush1.msra.mxu0 0.0
    %643 = vmatprep.subr.mxu0 0.0
    %644 = vmatpush1.msra.mxu0 0.0
    %645 = vmatprep.subr.mxu0 0.0
    %646 = vmatpush1.msra.mxu0 0.0
    %647 = vmatprep.subr.mxu0 0.0
    %648 = vmatpush1.msra.mxu0 0.0
    %649 = vmatprep.subr.mxu0 0.0
    %650 = vmatpush1.msra.mxu0 0.0
    %651 = vmatprep.mubr.f32.mxu0 0.0
    %652 = vmatmul.mubr.f32.gmra.mrb[0].mxu0 %v514
    %v653 = vpop.f32.mrb[0].mxu0
    %v654 = vadd.f32 %v519, %v653
    %v655 = vpop.f32.mrb[0].mxu0
    %656 = vmatprep.mubr.f32.mxu0 0.0
    %657 = vmatmul.mubr.f32.gmra.mrb[0].mxu0 %v515
    %v658 = vpop.f32.mrb[0].mxu0
    %v659 = vadd.f32 %v519, %v658
    %v660 = vpop.f32.mrb[0].mxu0
    %661 = vdwg.mxu0
    %662 = vst [vmem:[#allocation2] sm:$0xff] %v654
    %663 = vst [vmem:[#allocation2 + $0x8] sm:$0xff] %v659
    // Predicated region
    $region10: #{model3d_forward.1} parent=1 // pred_check
      _
    $region11: #{model3d_forward.1} parent=1 // pred_check_branch
      %665 = sbr.rel (0) target = $region13
    $region12: #{model3d_forward.1} parent=1 // pred_region
      %s667 = ssub.s32 256, 256
      %668 = vsyncadd [#allocation3], %s667
      %s669 = sshll.u32 [#allocation2], 4
      %s670 = int_to_ptr.vmem [resolvable:$true] %s669
      %675 = dma.vmem_to_hbm [thread:$0]  %s670, 256, %s2, [#allocation3], 128, 128, 8
    $region13: #{model3d_forward.1} parent=1 // pred_fallthru
      _
    // Predicated region
    $region14: #{model3d_forward.1} parent=1 // pred_check
      _
    $region15: #{model3d_forward.1} parent=1 // pred_check_branch
      %677 = sbr.rel (0) target = $region17
    $region16: #{model3d_forward.1} parent=1 // pred_region
      %678 = dma.done [#allocation3], 256
    $region17: #{model3d_forward.1} parent=1 // pred_fallthru
      _
    %679 = vsyncpa [#allocation3], 1

</llo_original>
